<compile_context>
chip_gen: v7x
topology: tpu7x:2x2x1
jax: 0.10.0
libtpu: 0.0.40
codegen_flags: <defaults>
</compile_context>

<pallas_src>
import jax
import jax.numpy as jnp
from jax.experimental import pallas as pl
from jax.experimental.pallas import tpu as pltpu

LANE = 128  # lane-pad width for the hidden/weight tiles (one vreg lane span)


def fcnn_kernel(x_ref, w_ref, b_ref, out_ref):
    # x_ref:   (TB, IN_PAD)      input rows (IN_PAD = input_dim rounded up to 8)
    # w_ref:   (3, LANE, LANE)   packed, zero-padded weights, (in, out) layout
    # b_ref:   (3, 1, LANE)      packed, zero-padded biases
    # out_ref: (TB, OUT_DIM)     true-width output (masked lane store)
    in_pad = x_ref.shape[1]
    out_dim = out_ref.shape[1]

    x = x_ref[...]

    # Linear 1 + ReLU (only the first `in_pad` rows of W1 are live)
    w1 = w_ref[0, :in_pad, :]
    h = jnp.dot(x, w1, preferred_element_type=jnp.float32) + b_ref[0]
    h = jnp.maximum(h, 0.0)

    # Linear 2 + ReLU
    h = jnp.dot(h, w_ref[1], preferred_element_type=jnp.float32) + b_ref[1]
    h = jnp.maximum(h, 0.0)

    # Linear 3 + sigmoid (exp runs on the EUP; padded lanes are sliced off
    # before the store so only `out_dim` lanes hit HBM)
    z = jnp.dot(h, w_ref[2], preferred_element_type=jnp.float32) + b_ref[2]
    out_ref[...] = 1.0 / (1.0 + jnp.exp(-z[:, :out_dim]))


def pack_params(params):
    """Zero-pad each (in, out) weight to (LANE, LANE) and stack; same for biases."""
    w1, b1, w2, b2, w3, b3 = params
    for w in (w1, w2, w3):
        assert w.shape[0] <= LANE and w.shape[1] <= LANE, "dims must be <= 128"

    def pad_w(w):
        return jnp.pad(w, ((0, LANE - w.shape[0]), (0, LANE - w.shape[1])))

    def pad_b(b):
        b = b.reshape(1, -1)
        return jnp.pad(b, ((0, 0), (0, LANE - b.shape[1])))

    w_pack = jnp.stack([pad_w(w1), pad_w(w2), pad_w(w3)], 0).astype(jnp.float32)
    b_pack = jnp.stack([pad_b(b1), pad_b(b2), pad_b(b3)], 0).astype(jnp.float32)
    output_dim = w3.shape[1]
    return w_pack, b_pack, output_dim


def fcnn_forward(x, w_pack, b_pack, output_dim, *, batch_tile=512):
    B, in_dim = x.shape

    # Round the feature dim up to a sublane multiple (8) only — no 128-wide HBM
    # pad.  For input_dim=16 this is a no-op.
    in_pad = ((in_dim + 7) // 8) * 8
    if in_pad != in_dim:
        x = jnp.pad(x, ((0, 0), (0, in_pad - in_dim)))

    tb = min(batch_tile, B)
    if tb != B:
        tb = max(8, (tb // 8) * 8)  # keep the sublane dim 8-aligned
    grid = (pl.cdiv(B, tb),)

    return pl.pallas_call(
        fcnn_kernel,
        out_shape=jax.ShapeDtypeStruct((B, output_dim), jnp.float32),
        grid=grid,
        in_specs=[
            pl.BlockSpec((tb, in_pad), lambda i: (i, 0)),
            pl.BlockSpec((3, LANE, LANE), lambda i: (0, 0, 0)),  # VMEM-resident
            pl.BlockSpec((3, 1, LANE), lambda i: (0, 0, 0)),     # VMEM-resident
        ],
        out_specs=pl.BlockSpec((tb, output_dim), lambda i: (i, 0)),
        compiler_params=pltpu.CompilerParams(
            dimension_semantics=("parallel",)),
    )(x, w_pack, b_pack)


def init_params(key, input_dim, hidden_dim, output_dim):
    """PyTorch nn.Linear default init; weights stored pre-transposed (in, out)."""
    dims = [
        (input_dim, hidden_dim),
        (hidden_dim, hidden_dim),
        (hidden_dim, output_dim),
    ]
    params = []
    for d_in, d_out in dims:
        key, kw, kb = jax.random.split(key, 3)
        bound = 1.0 / (d_in ** 0.5)
        w = jax.random.uniform(kw, (d_in, d_out), jnp.float32, -bound, bound)
        b = jax.random.uniform(kb, (d_out,), jnp.float32, -bound, bound)
        params.extend([w, b])
    return tuple(params)


def fcnn_reference(x, params):
    w1, b1, w2, b2, w3, b3 = params
    h = jnp.maximum(x @ w1 + b1, 0.0)
    h = jnp.maximum(h @ w2 + b2, 0.0)
    z = h @ w3 + b3
    return 1.0 / (1.0 + jnp.exp(-z))   # == torch.nn.functional.sigmoid


if __name__ == "__main__":
    B, input_dim, hidden_dim, output_dim = 8, 16, 32, 4

    key = jax.random.PRNGKey(0)
    key, kx = jax.random.split(key)
    x = jax.random.normal(kx, (B, input_dim), jnp.float32)
    params = init_params(key, input_dim, hidden_dim, output_dim)

    w_pack, b_pack, out_dim = pack_params(params)

    out = fcnn_forward(x, w_pack, b_pack, out_dim)
    jax.block_until_ready(out)

    ref = fcnn_reference(x, params)
    assert out.shape == (B, output_dim)
    assert jnp.allclose(out, ref, atol=1e-5, rtol=1e-5), float(
        jnp.max(jnp.abs(out - ref)))

    print("KERNEL_OK")
</pallas_src>

<mosaic_0001>
module attributes {stable_mosaic.version = 11 : i64} {
  func.func @fcnn_kernel(%arg0: i32, %arg1: memref<8x16xf32, #tpu.memory_space<vmem>>, %arg2: memref<3x128x128xf32, #tpu.memory_space<vmem>>, %arg3: memref<3x1x128xf32, #tpu.memory_space<vmem>>, %arg4: memref<8x4xf32, #tpu.memory_space<vmem>>) attributes {dimension_semantics = [#tpu.dimension_semantics<parallel>], iteration_bounds = array<i64: 1>, scalar_prefetch = 0 : i64, scratch_operands = 0 : i64, tpu.core_type = #tpu.core_type<tc>, window_params = [{transform_indices = @transform_0, window_bounds = array<i64: 8, 16>}, {pipeline_mode = #tpu.pipeline_mode<synchronous>, transform_indices = @transform_1, window_bounds = array<i64: 3, 128, 128>}, {pipeline_mode = #tpu.pipeline_mode<synchronous>, transform_indices = @transform_2, window_bounds = array<i64: 3, 1, 128>}, {transform_indices = @transform_3, window_bounds = array<i64: 8, 4>}]} {
    %c0 = arith.constant 0 : index
    %c0_0 = arith.constant 0 : index
    %0 = vector.load %arg1[%c0, %c0_0] : memref<8x16xf32, #tpu.memory_space<vmem>>, vector<8x16xf32>
    %c0_1 = arith.constant 0 : index
    %c0_2 = arith.constant 0 : index
    %c0_3 = arith.constant 0 : index
    %1 = vector.load %arg2[%c0_1, %c0_2, %c0_3] : memref<3x128x128xf32, #tpu.memory_space<vmem>>, vector<1x16x128xf32>
    %2 = vector.shape_cast %1 : vector<1x16x128xf32> to vector<16x128xf32>
    %cst = arith.constant dense<0.000000e+00> : vector<8x128xf32>
    %3 = tpu.matmul %0, %2, %cst {dimension_numbers = #tpu.dot_dimension_numbers<[1], [0], [0], [1], [0, 0, 1, 1], [], []>} : vector<8x16xf32>, vector<16x128xf32>, vector<8x128xf32> -> vector<8x128xf32>
    %c0_4 = arith.constant 0 : index
    %c0_5 = arith.constant 0 : index
    %c0_6 = arith.constant 0 : index
    %4 = vector.load %arg3[%c0_4, %c0_5, %c0_6] : memref<3x1x128xf32, #tpu.memory_space<vmem>>, vector<1x1x128xf32>
    %5 = vector.shape_cast %4 : vector<1x1x128xf32> to vector<1x128xf32>
    %6 = vector.broadcast %5 : vector<1x128xf32> to vector<8x128xf32>
    %7 = arith.addf %3, %6 : vector<8x128xf32>
    %cst_7 = arith.constant 0.000000e+00 : f32
    %8 = vector.broadcast %cst_7 : f32 to vector<8x128xf32>
    %9 = arith.maximumf %7, %8 : vector<8x128xf32>
    %c1 = arith.constant 1 : index
    %c0_8 = arith.constant 0 : index
    %c0_9 = arith.constant 0 : index
    %10 = vector.load %arg2[%c1, %c0_8, %c0_9] : memref<3x128x128xf32, #tpu.memory_space<vmem>>, vector<1x128x128xf32>
    %11 = vector.shape_cast %10 : vector<1x128x128xf32> to vector<128x128xf32>
    %cst_10 = arith.constant dense<0.000000e+00> : vector<8x128xf32>
    %12 = tpu.matmul %9, %11, %cst_10 {dimension_numbers = #tpu.dot_dimension_numbers<[1], [0], [0], [1], [0, 0, 1, 1], [], []>} : vector<8x128xf32>, vector<128x128xf32>, vector<8x128xf32> -> vector<8x128xf32>
    %c1_11 = arith.constant 1 : index
    %c0_12 = arith.constant 0 : index
    %c0_13 = arith.constant 0 : index
    %13 = vector.load %arg3[%c1_11, %c0_12, %c0_13] : memref<3x1x128xf32, #tpu.memory_space<vmem>>, vector<1x1x128xf32>
    %14 = vector.shape_cast %13 : vector<1x1x128xf32> to vector<1x128xf32>
    %15 = vector.broadcast %14 : vector<1x128xf32> to vector<8x128xf32>
    %16 = arith.addf %12, %15 : vector<8x128xf32>
    %cst_14 = arith.constant 0.000000e+00 : f32
    %17 = vector.broadcast %cst_14 : f32 to vector<8x128xf32>
    %18 = arith.maximumf %16, %17 : vector<8x128xf32>
    %c2 = arith.constant 2 : index
    %c0_15 = arith.constant 0 : index
    %c0_16 = arith.constant 0 : index
    %19 = vector.load %arg2[%c2, %c0_15, %c0_16] : memref<3x128x128xf32, #tpu.memory_space<vmem>>, vector<1x128x128xf32>
    %20 = vector.shape_cast %19 : vector<1x128x128xf32> to vector<128x128xf32>
    %cst_17 = arith.constant dense<0.000000e+00> : vector<8x128xf32>
    %21 = tpu.matmul %18, %20, %cst_17 {dimension_numbers = #tpu.dot_dimension_numbers<[1], [0], [0], [1], [0, 0, 1, 1], [], []>} : vector<8x128xf32>, vector<128x128xf32>, vector<8x128xf32> -> vector<8x128xf32>
    %c2_18 = arith.constant 2 : index
    %c0_19 = arith.constant 0 : index
    %c0_20 = arith.constant 0 : index
    %22 = vector.load %arg3[%c2_18, %c0_19, %c0_20] : memref<3x1x128xf32, #tpu.memory_space<vmem>>, vector<1x1x128xf32>
    %23 = vector.shape_cast %22 : vector<1x1x128xf32> to vector<1x128xf32>
    %24 = vector.broadcast %23 : vector<1x128xf32> to vector<8x128xf32>
    %25 = arith.addf %21, %24 : vector<8x128xf32>
    %26 = vector.extract_strided_slice %25 {offsets = [0, 0], sizes = [8, 4], strides = [1, 1]} : vector<8x128xf32> to vector<8x4xf32>
    %cst_21 = arith.constant 0.000000e+00 : f32
    %27 = vector.broadcast %cst_21 : f32 to vector<8x4xf32>
    %28 = arith.subf %27, %26 : vector<8x4xf32>
    %29 = math.exp %28 : vector<8x4xf32>
    %cst_22 = arith.constant 1.000000e+00 : f32
    %30 = vector.broadcast %cst_22 : f32 to vector<8x4xf32>
    %31 = arith.addf %30, %29 : vector<8x4xf32>
    %cst_23 = arith.constant 1.000000e+00 : f32
    %32 = vector.broadcast %cst_23 : f32 to vector<8x4xf32>
    %33 = arith.divf %32, %31 : vector<8x4xf32>
    %c0_24 = arith.constant 0 : index
    %c0_25 = arith.constant 0 : index
    %34 = vector.load %arg4[%c0_24, %c0_25] : memref<8x4xf32, #tpu.memory_space<vmem>>, vector<8x4xf32>
    tpu.vector_store %arg4[%c0_24, %c0_25], %33 {strides = array<i32>} : memref<8x4xf32, #tpu.memory_space<vmem>>, vector<8x4xf32>,
    return
  }
  func.func @transform_0(%arg0: i32) -> (i32, i32) {
    %c0_i32 = arith.constant 0 : i32
    %c0_i32_0 = arith.constant 0 : i32
    return %arg0, %c0_i32 : i32, i32
  }
  func.func @transform_1(%arg0: i32) -> (i32, i32, i32) {
    %c0_i32 = arith.constant 0 : i32
    %c0_i32_0 = arith.constant 0 : i32
    %c0_i32_1 = arith.constant 0 : i32
    %c0_i32_2 = arith.constant 0 : i32
    return %c0_i32, %c0_i32_0, %c0_i32_1 : i32, i32, i32
  }
  func.func @transform_2(%arg0: i32) -> (i32, i32, i32) {
    %c0_i32 = arith.constant 0 : i32
    %c0_i32_0 = arith.constant 0 : i32
    %c0_i32_1 = arith.constant 0 : i32
    %c0_i32_2 = arith.constant 0 : i32
    return %c0_i32, %c0_i32_0, %c0_i32_1 : i32, i32, i32
  }
  func.func @transform_3(%arg0: i32) -> (i32, i32) {
    %c0_i32 = arith.constant 0 : i32
    %c0_i32_0 = arith.constant 0 : i32
    return %arg0, %c0_i32 : i32, i32
  }
}

</mosaic_0001>

<llo_original>
// kernel: tpu_custom_call.1
$region0: #{tpu_custom_call.1}
  #allocation0 [shape = 'u32[]', space=smem, size = 0x4, offset = 0x4, fixed_abs, tag = 'smem constant byte address 0x4 - core index']
  #allocation1 [shape = 'u32[144,128]{1,0:T(1,128)}', space=vmem, size = 0x12000, scoped, tag = 'internal scratch']
  %s0 = inlined_call_operand.hbm [shape: f32[8,16], index: 0, kind: input, shape index: {}]
  %s1 = inlined_call_operand.hbm [shape: f32[3,128,128], index: 1, kind: input, shape index: {}]
  %s2 = inlined_call_operand.vmem [shape: f32[3,1,128], index: 2, kind: input, shape index: {}]
  %s3 = inlined_call_operand.vmem [shape: f32[8,4], index: 3, kind: output, shape index: {}]
  %s4 = sld [smem:[#allocation0]]
  $region30: #{tpu_custom_call.1} parent=0
    _
  %s6 = ssub.s32 1, %s4
  %s7 = scalar_select 0, %s6, %s4
  $region1: #{tpu_custom_call.1} parent=0
    #allocation2 [shape = 'u8[4096]{0}', space=vmem, size = 0x1000, scoped, tag = 'input window, operand 0, single buffered']
    #allocation3 [shape = 's32[1]{0}', space=sflag, size = 0x4, scoped, tag = 'scoped memory for tpu_custom_call.1']
    #allocation4 [shape = 'u8[196608]{0}', space=vmem, size = 0x30000, scoped, tag = 'input window, operand 1, single buffered']
    #allocation5 [shape = 's32[1]{0}', space=sflag, size = 0x4, scoped, tag = 'scoped memory for tpu_custom_call.1']
    %8 = vsyncpa [#allocation3], 0
    %9 = vsyncpa [#allocation5], 0
    // Predicated region
    $region2: #{tpu_custom_call.1} parent=1 // pred_check
      _
    $region3: #{tpu_custom_call.1} parent=1 // pred_check_branch
      %11 = sbr.rel (0) target = $region5
    $region4: #{tpu_custom_call.1} parent=1 // pred_region
      %s13 = ssub.s32 128, 128
      %14 = vsyncadd [#allocation3], %s13
      %s16 = sshll.u32 [#allocation2], 4
      %s17 = int_to_ptr.vmem [resolvable:$true] %s16
      %19 = dma.hbm_to_vmem [thread:$0]  %s0, 128, %s17, [#allocation3]
    $region5: #{tpu_custom_call.1} parent=1 // pred_fallthru
      _
    // Predicated region
    $region6: #{tpu_custom_call.1} parent=1 // pred_check
      _
    $region7: #{tpu_custom_call.1} parent=1 // pred_check_branch
      %21 = sbr.rel (0) target = $region9
    $region8: #{tpu_custom_call.1} parent=1 // pred_region
      %s23 = ssub.s32 6144, 6144
      %24 = vsyncadd [#allocation5], %s23
      %s25 = sshll.u32 [#allocation4], 4
      %s26 = int_to_ptr.vmem [resolvable:$true] %s25
      %31 = dma.hbm_to_vmem [thread:$0]  %s1, 6144, %s26, [#allocation5], 128, 128, 8
    $region9: #{tpu_custom_call.1} parent=1 // pred_fallthru
      _
    // Predicated region
    $region10: #{tpu_custom_call.1} parent=1 // pred_check
      _
    $region11: #{tpu_custom_call.1} parent=1 // pred_check_branch
      %33 = sbr.rel (0) target = $region13
    $region12: #{tpu_custom_call.1} parent=1 // pred_region
      _
    $region13: #{tpu_custom_call.1} parent=1 // pred_fallthru
      _
    // Predicated region
    $region14: #{tpu_custom_call.1} parent=1 // pred_check
      _
    $region15: #{tpu_custom_call.1} parent=1 // pred_check_branch
      %35 = sbr.rel (0) target = $region17
    $region16: #{tpu_custom_call.1} parent=1 // pred_region
      %36 = dma.done [#allocation3], 128
    $region17: #{tpu_custom_call.1} parent=1 // pred_fallthru
      _
    // Predicated region
    $region18: #{tpu_custom_call.1} parent=1 // pred_check
      _
    $region19: #{tpu_custom_call.1} parent=1 // pred_check_branch
      %38 = sbr.rel (0) target = $region21
    $region20: #{tpu_custom_call.1} parent=1 // pred_region
      %39 = dma.done [#allocation5], 6144
    $region21: #{tpu_custom_call.1} parent=1 // pred_fallthru
      _
    %v40 = vld [vmem:[#allocation2] sm:$0xff]
    %v41 = vld [vmem:[#allocation4] sm:$0xff]
    %v42 = vld [vmem:[#allocation4 + $0x8] sm:$0xff]
    %v43 = vld [vmem:[%s2] sm:$0x1]
    %v45 = vlaneseq
    %v46 = vshrl.u32 %v45, 7
    %v47 = vsub.s32 0, %v46
    %v48 = vrot.slane %v43, %v47
    %vm50 = vcmask 130048
    %v52 = vsel %vm50, %v40, 0
    %54 = vmatprep.subr.mxu0 0.0
    %55 = vmatpush1.msra.mxu0 %v41
    %56 = vmatprep.subr.mxu0 0.0
    %57 = vmatpush1.msra.mxu0 %v42
    %58 = vmatprep.subr.mxu0 0.0
    %59 = vmatpush1.msra.mxu0 0.0
    %60 = vmatprep.subr.mxu0 0.0
    %61 = vmatpush1.msra.mxu0 0.0
    %62 = vmatprep.subr.mxu0 0.0
    %63 = vmatpush1.msra.mxu0 0.0
    %64 = vmatprep.subr.mxu0 0.0
    %65 = vmatpush1.msra.mxu0 0.0
    %66 = vmatprep.subr.mxu0 0.0
    %67 = vmatpush1.msra.mxu0 0.0
    %68 = vmatprep.subr.mxu0 0.0
    %69 = vmatpush1.msra.mxu0 0.0
    %70 = vmatprep.subr.mxu0 0.0
    %71 = vmatpush1.msra.mxu0 0.0
    %72 = vmatprep.subr.mxu0 0.0
    %73 = vmatpush1.msra.mxu0 0.0
    %74 = vmatprep.subr.mxu0 0.0
    %75 = vmatpush1.msra.mxu0 0.0
    %76 = vmatprep.subr.mxu0 0.0
    %77 = vmatpush1.msra.mxu0 0.0
    %78 = vmatprep.subr.mxu0 0.0
    %79 = vmatpush1.msra.mxu0 0.0
    %80 = vmatprep.subr.mxu0 0.0
    %81 = vmatpush1.msra.mxu0 0.0
    %82 = vmatprep.subr.mxu0 0.0
    %83 = vmatpush1.msra.mxu0 0.0
    %84 = vmatprep.subr.mxu0 0.0
    %85 = vmatpush1.msra.mxu0 0.0
    %86 = vmatprep.subr.mxu0 0.0
    %87 = vmatpush1.msra.mxu0 0.0
    %88 = vmatprep.subr.mxu0 0.0
    %89 = vmatpush1.msra.mxu0 0.0
    %90 = vmatprep.subr.mxu0 0.0
    %91 = vmatpush1.msra.mxu0 0.0
    %92 = vmatprep.subr.mxu0 0.0
    %93 = vmatpush1.msra.mxu0 0.0
    %94 = vmatprep.subr.mxu0 0.0
    %95 = vmatpush1.msra.mxu0 0.0
    %96 = vmatprep.subr.mxu0 0.0
    %97 = vmatpush1.msra.mxu0 0.0
    %98 = vmatprep.subr.mxu0 0.0
    %99 = vmatpush1.msra.mxu0 0.0
    %100 = vmatprep.subr.mxu0 0.0
    %101 = vmatpush1.msra.mxu0 0.0
    %102 = vmatprep.subr.mxu0 0.0
    %103 = vmatpush1.msra.mxu0 0.0
    %104 = vmatprep.subr.mxu0 0.0
    %105 = vmatpush1.msra.mxu0 0.0
    %106 = vmatprep.subr.mxu0 0.0
    %107 = vmatpush1.msra.mxu0 0.0
    %108 = vmatprep.subr.mxu0 0.0
    %109 = vmatpush1.msra.mxu0 0.0
    %110 = vmatprep.subr.mxu0 0.0
    %111 = vmatpush1.msra.mxu0 0.0
    %112 = vmatprep.subr.mxu0 0.0
    %113 = vmatpush1.msra.mxu0 0.0
    %114 = vmatprep.subr.mxu0 0.0
    %115 = vmatpush1.msra.mxu0 0.0
    %116 = vmatprep.subr.mxu0 0.0
    %117 = vmatpush1.msra.mxu0 0.0
    %118 = vmatprep.mubr.f32.mxu0 0.0
    %119 = vmatmul.mubr.f32.gmra.mrb[0].mxu0 %v52
    %v120 = vpop.f32.mrb[0].mxu0
    %v121 = vadd.f32 %v48, %v120
    %v122 = vpop.f32.mrb[0].mxu0
    %123 = vdwg.mxu0
    %v124 = vmax.f32 %v121, 0.0
    %s125 = scalar_lea.vmem [#allocation4], 128
    %v126 = vld [vmem:[%s125] sm:$0xff]
    %v127 = vld [vmem:[%s125 + $0x8] sm:$0xff]
    %v128 = vld [vmem:[%s125 + $0x10] sm:$0xff]
    %v129 = vld [vmem:[%s125 + $0x18] sm:$0xff]
    %v130 = vld [vmem:[%s125 + $0x20] sm:$0xff]
    %v131 = vld [vmem:[%s125 + $0x28] sm:$0xff]
    %v132 = vld [vmem:[%s125 + $0x30] sm:$0xff]
    %v133 = vld [vmem:[%s125 + $0x38] sm:$0xff]
    %v134 = vld [vmem:[%s125 + $0x40] sm:$0xff]
    %v135 = vld [vmem:[%s125 + $0x48] sm:$0xff]
    %v136 = vld [vmem:[%s125 + $0x50] sm:$0xff]
    %v137 = vld [vmem:[%s125 + $0x58] sm:$0xff]
    %v138 = vld [vmem:[%s125 + $0x60] sm:$0xff]
    %v139 = vld [vmem:[%s125 + $0x68] sm:$0xff]
    %v140 = vld [vmem:[%s125 + $0x70] sm:$0xff]
    %v141 = vld [vmem:[%s125 + $0x78] sm:$0xff]
    %s142 = scalar_lea.vmem %s2, 1
    %v143 = vld [vmem:[%s142] sm:$0x1]
    %v145 = vlaneseq
    %v146 = vshrl.u32 %v145, 7
    %v147 = vsub.s32 0, %v146
    %v148 = vrot.slane %v143, %v147
    %150 = vmatprep.subr.mxu0 0.0
    %151 = vmatpush1.msra.mxu0 %v126
    %152 = vmatprep.subr.mxu0 0.0
    %153 = vmatpush1.msra.mxu0 %v127
    %154 = vmatprep.subr.mxu0 0.0
    %155 = vmatpush1.msra.mxu0 %v128
    %156 = vmatprep.subr.mxu0 0.0
    %157 = vmatpush1.msra.mxu0 %v129
    %158 = vmatprep.subr.mxu0 0.0
    %159 = vmatpush1.msra.mxu0 %v130
    %160 = vmatprep.subr.mxu0 0.0
    %161 = vmatpush1.msra.mxu0 %v131
    %162 = vmatprep.subr.mxu0 0.0
    %163 = vmatpush1.msra.mxu0 %v132
    %164 = vmatprep.subr.mxu0 0.0
    %165 = vmatpush1.msra.mxu0 %v133
    %166 = vmatprep.subr.mxu0 0.0
    %167 = vmatpush1.msra.mxu0 %v134
    %168 = vmatprep.subr.mxu0 0.0
    %169 = vmatpush1.msra.mxu0 %v135
    %170 = vmatprep.subr.mxu0 0.0
    %171 = vmatpush1.msra.mxu0 %v136
    %172 = vmatprep.subr.mxu0 0.0
    %173 = vmatpush1.msra.mxu0 %v137
    %174 = vmatprep.subr.mxu0 0.0
    %175 = vmatpush1.msra.mxu0 %v138
    %176 = vmatprep.subr.mxu0 0.0
    %177 = vmatpush1.msra.mxu0 %v139
    %178 = vmatprep.subr.mxu0 0.0
    %179 = vmatpush1.msra.mxu0 %v140
    %180 = vmatprep.subr.mxu0 0.0
    %181 = vmatpush1.msra.mxu0 %v141
    %182 = vmatprep.subr.mxu0 0.0
    %183 = vmatpush1.msra.mxu0 0.0
    %184 = vmatprep.subr.mxu0 0.0
    %185 = vmatpush1.msra.mxu0 0.0
    %186 = vmatprep.subr.mxu0 0.0
    %187 = vmatpush1.msra.mxu0 0.0
    %188 = vmatprep.subr.mxu0 0.0
    %189 = vmatpush1.msra.mxu0 0.0
    %190 = vmatprep.subr.mxu0 0.0
    %191 = vmatpush1.msra.mxu0 0.0
    %192 = vmatprep.subr.mxu0 0.0
    %193 = vmatpush1.msra.mxu0 0.0
    %194 = vmatprep.subr.mxu0 0.0
    %195 = vmatpush1.msra.mxu0 0.0
    %196 = vmatprep.subr.mxu0 0.0
    %197 = vmatpush1.msra.mxu0 0.0
    %198 = vmatprep.subr.mxu0 0.0
    %199 = vmatpush1.msra.mxu0 0.0
    %200 = vmatprep.subr.mxu0 0.0
    %201 = vmatpush1.msra.mxu0 0.0
    %202 = vmatprep.subr.mxu0 0.0
    %203 = vmatpush1.msra.mxu0 0.0
    %204 = vmatprep.subr.mxu0 0.0
    %205 = vmatpush1.msra.mxu0 0.0
    %206 = vmatprep.subr.mxu0 0.0
    %207 = vmatpush1.msra.mxu0 0.0
    %208 = vmatprep.subr.mxu0 0.0
    %209 = vmatpush1.msra.mxu0 0.0
    %210 = vmatprep.subr.mxu0 0.0
    %211 = vmatpush1.msra.mxu0 0.0
    %212 = vmatprep.subr.mxu0 0.0
    %213 = vmatpush1.msra.mxu0 0.0
    %214 = vmatprep.mubr.f32.mxu0 0.0
    %215 = vmatmul.mubr.f32.gmra.mrb[0].mxu0 %v124
    %v216 = vpop.f32.mrb[0].mxu0
    %v217 = vadd.f32 %v148, %v216
    %v218 = vpop.f32.mrb[0].mxu0
    %219 = vdwg.mxu0
    %v220 = vmax.f32 %v217, 0.0
    %s221 = scalar_lea.vmem [#allocation4], 256
    %v222 = vld [vmem:[%s221] sm:$0xff]
    %v223 = vld [vmem:[%s221 + $0x8] sm:$0xff]
    %v224 = vld [vmem:[%s221 + $0x10] sm:$0xff]
    %v225 = vld [vmem:[%s221 + $0x18] sm:$0xff]
    %v226 = vld [vmem:[%s221 + $0x20] sm:$0xff]
    %v227 = vld [vmem:[%s221 + $0x28] sm:$0xff]
    %v228 = vld [vmem:[%s221 + $0x30] sm:$0xff]
    %v229 = vld [vmem:[%s221 + $0x38] sm:$0xff]
    %v230 = vld [vmem:[%s221 + $0x40] sm:$0xff]
    %v231 = vld [vmem:[%s221 + $0x48] sm:$0xff]
    %v232 = vld [vmem:[%s221 + $0x50] sm:$0xff]
    %v233 = vld [vmem:[%s221 + $0x58] sm:$0xff]
    %v234 = vld [vmem:[%s221 + $0x60] sm:$0xff]
    %v235 = vld [vmem:[%s221 + $0x68] sm:$0xff]
    %v236 = vld [vmem:[%s221 + $0x70] sm:$0xff]
    %v237 = vld [vmem:[%s221 + $0x78] sm:$0xff]
    %s238 = scalar_lea.vmem %s2, 2
    %v239 = vld [vmem:[%s238] sm:$0x1]
    %v241 = vlaneseq
    %v242 = vshrl.u32 %v241, 7
    %v243 = vsub.s32 0, %v242
    %v244 = vrot.slane %v239, %v243
    %246 = vmatprep.subr.mxu0 0.0
    %247 = vmatpush1.msra.mxu0 %v222
    %248 = vmatprep.subr.mxu0 0.0
    %249 = vmatpush1.msra.mxu0 %v223
    %250 = vmatprep.subr.mxu0 0.0
    %251 = vmatpush1.msra.mxu0 %v224
    %252 = vmatprep.subr.mxu0 0.0
    %253 = vmatpush1.msra.mxu0 %v225
    %254 = vmatprep.subr.mxu0 0.0
    %255 = vmatpush1.msra.mxu0 %v226
    %256 = vmatprep.subr.mxu0 0.0
    %257 = vmatpush1.msra.mxu0 %v227
    %258 = vmatprep.subr.mxu0 0.0
    %259 = vmatpush1.msra.mxu0 %v228
    %260 = vmatprep.subr.mxu0 0.0
    %261 = vmatpush1.msra.mxu0 %v229
    %262 = vmatprep.subr.mxu0 0.0
    %263 = vmatpush1.msra.mxu0 %v230
    %264 = vmatprep.subr.mxu0 0.0
    %265 = vmatpush1.msra.mxu0 %v231
    %266 = vmatprep.subr.mxu0 0.0
    %267 = vmatpush1.msra.mxu0 %v232
    %268 = vmatprep.subr.mxu0 0.0
    %269 = vmatpush1.msra.mxu0 %v233
    %270 = vmatprep.subr.mxu0 0.0
    %271 = vmatpush1.msra.mxu0 %v234
    %272 = vmatprep.subr.mxu0 0.0
    %273 = vmatpush1.msra.mxu0 %v235
    %274 = vmatprep.subr.mxu0 0.0
    %275 = vmatpush1.msra.mxu0 %v236
    %276 = vmatprep.subr.mxu0 0.0
    %277 = vmatpush1.msra.mxu0 %v237
    %278 = vmatprep.subr.mxu0 0.0
    %279 = vmatpush1.msra.mxu0 0.0
    %280 = vmatprep.subr.mxu0 0.0
    %281 = vmatpush1.msra.mxu0 0.0
    %282 = vmatprep.subr.mxu0 0.0
    %283 = vmatpush1.msra.mxu0 0.0
    %284 = vmatprep.subr.mxu0 0.0
    %285 = vmatpush1.msra.mxu0 0.0
    %286 = vmatprep.subr.mxu0 0.0
    %287 = vmatpush1.msra.mxu0 0.0
    %288 = vmatprep.subr.mxu0 0.0
    %289 = vmatpush1.msra.mxu0 0.0
    %290 = vmatprep.subr.mxu0 0.0
    %291 = vmatpush1.msra.mxu0 0.0
    %292 = vmatprep.subr.mxu0 0.0
    %293 = vmatpush1.msra.mxu0 0.0
    %294 = vmatprep.subr.mxu0 0.0
    %295 = vmatpush1.msra.mxu0 0.0
    %296 = vmatprep.subr.mxu0 0.0
    %297 = vmatpush1.msra.mxu0 0.0
    %298 = vmatprep.subr.mxu0 0.0
    %299 = vmatpush1.msra.mxu0 0.0
    %300 = vmatprep.subr.mxu0 0.0
    %301 = vmatpush1.msra.mxu0 0.0
    %302 = vmatprep.subr.mxu0 0.0
    %303 = vmatpush1.msra.mxu0 0.0
    %304 = vmatprep.subr.mxu0 0.0
    %305 = vmatpush1.msra.mxu0 0.0
    %306 = vmatprep.subr.mxu0 0.0
    %307 = vmatpush1.msra.mxu0 0.0
    %308 = vmatprep.subr.mxu0 0.0
    %309 = vmatpush1.msra.mxu0 0.0
    %310 = vmatprep.mubr.f32.mxu0 0.0
    %311 = vmatmul.mubr.f32.gmra.mrb[0].mxu0 %v220
    %v312 = vpop.f32.mrb[0].mxu0
    %v313 = vadd.f32 %v244, %v312
    %v314 = vpop.f32.mrb[0].mxu0
    %315 = vdwg.mxu0
    %v316 = vsub.f32 0.0, %v313
    %v317 = vmul.f32 %v316, 1.442695
    %v318 = vpow.pop %v317
    %v319 = vadd.f32 %v318, 1.0
    %v320 = vrcp.pop %v319
    %v321 = vmul.f32 1.0, %v320
    %vm322 = vcmask 31744
    %323 = vst.msk [vmem:[%s3] sm:$0xff] %vm322, %v321
    // Predicated region
    $region22: #{tpu_custom_call.1} parent=1 // pred_check
      _
    $region23: #{tpu_custom_call.1} parent=1 // pred_check_branch
      %325 = sbr.rel (0) target = $region25
    $region24: #{tpu_custom_call.1} parent=1 // pred_region
      _
    $region25: #{tpu_custom_call.1} parent=1 // pred_fallthru
      _
    // Predicated region
    $region26: #{tpu_custom_call.1} parent=1 // pred_check
      _
    $region27: #{tpu_custom_call.1} parent=1 // pred_check_branch
      %327 = sbr.rel (0) target = $region29
    $region28: #{tpu_custom_call.1} parent=1 // pred_region
      _
    $region29: #{tpu_custom_call.1} parent=1 // pred_fallthru
      _
    %328 = vsyncpa [#allocation3], 1
    %329 = vsyncpa [#allocation5], 1

</llo_original>
